<compile_context>
chip_gen: v7x
topology: tpu7x:2x2x1
jax: 0.10.0
libtpu: 0.0.40
codegen_flags: <defaults>
</compile_context>

<pallas_src>
import jax
import jax.numpy as jnp
from jax.experimental import pallas as pl
from jax.experimental.pallas import tpu as pltpu


def _actor_kernel(obs_ref,                       # [TILE_B, repr_dim]
                  w1, w2, w3, w4, w5, w6, w7, w8,  # [in, out] each (VMEM-resident)
                  b_ref,                         # [8, max_out] packed biases
                  mu_ref):                       # [TILE_B, action_dim]
    h = obs_ref[...]
    ws = (w1, w2, w3, w4, w5, w6, w7, w8)

    # 7 x (Linear -> ReLU)   (static Python loop: unrolled at trace time)
    for i in range(7):
        out_dim = ws[i].shape[1]
        h = jnp.dot(h, ws[i][...], preferred_element_type=jnp.float32)
        h = h + b_ref[i:i + 1, :out_dim]
        h = jnp.maximum(h, 0.0)

    # Final Linear -> Tanh (inside Sequential) -> tanh (in forward): double tanh.
    out_dim = ws[7].shape[1]
    y = jnp.dot(h, ws[7][...], preferred_element_type=jnp.float32)
    y = y + b_ref[7:8, :out_dim]
    mu_ref[...] = jnp.tanh(jnp.tanh(y)).astype(mu_ref.dtype)

    # TODO(synk): utils.TruncatedNormal(mu, std) distribution object has no Pallas
    # equivalent; the wrapper returns its parameters (mu, std) instead.


def _round_up(x, m):
    return ((x + m - 1) // m) * m


def actor_forward(obs, std_scalar, params, *, tile_b=256):
    """obs: [B, repr_dim] f32.  std_scalar: python float or 0-d/traced array.
    params: list of 8 (w, b) pairs with w [in, out], b [out] or [1, out]."""
    B, repr_dim = obs.shape
    hidden_dim = params[0][0].shape[1]
    action_dim = params[-1][0].shape[1]
    obs = obs.astype(jnp.float32)

    # Pack all biases into a single [8, max_out] f32 array (zero padded).
    max_out = max(hidden_dim, action_dim)
    b_pack = jnp.zeros((8, max_out), dtype=jnp.float32)
    weights = []
    for i, (w, b) in enumerate(params):
        b_row = jnp.reshape(jnp.asarray(b, dtype=jnp.float32), (-1,))  # accept [out] or [1,out]
        b_pack = b_pack.at[i, :b_row.shape[0]].set(b_row)
        weights.append(jnp.asarray(w, dtype=jnp.float32))

    # Batch tiling: tile must be a multiple of 8 sublanes; pad B up to it.
    tile_b = min(tile_b, _round_up(B, 8))
    tile_b = _round_up(tile_b, 8)
    b_pad = _round_up(B, tile_b)
    if b_pad != B:
        obs = jnp.pad(obs, ((0, b_pad - B), (0, 0)))
    grid = (b_pad // tile_b,)

    obs_spec = pl.BlockSpec((tile_b, repr_dim), lambda i: (i, 0))
    # Weights / biases: full-array blocks with constant index_map -> VMEM-resident.
    w_specs = [pl.BlockSpec(w.shape, lambda i: (0, 0)) for w in weights]
    b_spec = pl.BlockSpec((8, max_out), lambda i: (0, 0))
    mu_spec = pl.BlockSpec((tile_b, action_dim), lambda i: (i, 0))

    mu = pl.pallas_call(
        _actor_kernel,
        out_shape=jax.ShapeDtypeStruct((b_pad, action_dim), jnp.float32),
        grid=grid,
        in_specs=[obs_spec] + w_specs + [b_spec],
        out_specs=mu_spec,
        compiler_params=pltpu.CompilerParams(
            dimension_semantics=("parallel",)),
    )(obs, *weights, b_pack)

    mu = mu[:B]
    # std = torch.ones_like(mu) * std  -> constant broadcast, done outside the kernel.
    std = jnp.full((B, action_dim), std_scalar, dtype=jnp.float32)
    return mu, std


def make_params(key, repr_dim, hidden_dim, action_dim):
    """Deterministic synthetic init (stand-in for utils.weight_init)."""
    dims = [repr_dim] + [hidden_dim] * 7 + [action_dim]
    params = []
    for i in range(8):
        key, kw = jax.random.split(key)
        fan_in, fan_out = dims[i], dims[i + 1]
        scale = 1.0 / jnp.sqrt(jnp.float32(fan_in))
        w = jax.random.normal(kw, (fan_in, fan_out), dtype=jnp.float32) * scale
        b = jnp.zeros((1, fan_out), dtype=jnp.float32)
        params.append((w, b))
    return params


def _reference(obs, std_scalar, params):
    x = obs
    for i, (w, b) in enumerate(params):
        x = x @ w + jnp.reshape(b, (1, -1))
        if i < 7:
            x = jnp.maximum(x, 0.0)
    mu = jnp.tanh(jnp.tanh(x))
    std = jnp.full_like(mu, std_scalar)
    return mu, std


if __name__ == "__main__":
    repr_dim = 64
    hidden_dim = 32
    action_dim = 6
    std = 0.1

    key = jax.random.PRNGKey(0)
    key, k1, k2 = jax.random.split(key, 3)
    params = make_params(key, repr_dim, hidden_dim, action_dim)

    # Case 1: small batch, single grid step.
    obs1 = jax.random.normal(k1, (8, repr_dim), dtype=jnp.float32)
    mu1, std1 = actor_forward(obs1, std, params)
    jax.block_until_ready((mu1, std1))
    mu1_ref, std1_ref = _reference(obs1, std, params)
    assert mu1.shape == (8, action_dim)
    assert jnp.allclose(mu1, mu1_ref, atol=1e-5), "mu mismatch (case 1)"
    assert jnp.allclose(std1, std1_ref, atol=1e-6), "std mismatch (case 1)"

    # Case 2: batch not a multiple of the tile -> exercises multi-step grid + padding.
    obs2 = jax.random.normal(k2, (20, repr_dim), dtype=jnp.float32)
    mu2, std2 = actor_forward(obs2, std, params, tile_b=8)
    jax.block_until_ready((mu2, std2))
    mu2_ref, std2_ref = _reference(obs2, std, params)
    assert mu2.shape == (20, action_dim)
    assert jnp.allclose(mu2, mu2_ref, atol=1e-5), "mu mismatch (case 2)"
    assert jnp.allclose(std2, std2_ref, atol=1e-6), "std mismatch (case 2)"

    print("KERNEL_OK")
</pallas_src>

<mosaic_0001>
module attributes {stable_mosaic.version = 11 : i64} {
  func.func @_actor_kernel(%arg0: i32, %arg1: memref<8x64xf32, #tpu.memory_space<vmem>>, %arg2: memref<64x32xf32, #tpu.memory_space<vmem>>, %arg3: memref<32x32xf32, #tpu.memory_space<vmem>>, %arg4: memref<32x32xf32, #tpu.memory_space<vmem>>, %arg5: memref<32x32xf32, #tpu.memory_space<vmem>>, %arg6: memref<32x32xf32, #tpu.memory_space<vmem>>, %arg7: memref<32x32xf32, #tpu.memory_space<vmem>>, %arg8: memref<32x32xf32, #tpu.memory_space<vmem>>, %arg9: memref<32x6xf32, #tpu.memory_space<vmem>>, %arg10: memref<8x32xf32, #tpu.memory_space<vmem>>, %arg11: memref<8x6xf32, #tpu.memory_space<vmem>>) attributes {dimension_semantics = [#tpu.dimension_semantics<parallel>], iteration_bounds = array<i64: 1>, scalar_prefetch = 0 : i64, scratch_operands = 0 : i64, tpu.core_type = #tpu.core_type<tc>, window_params = [{transform_indices = @transform_0, window_bounds = array<i64: 8, 64>}, {pipeline_mode = #tpu.pipeline_mode<synchronous>, transform_indices = @transform_1, window_bounds = array<i64: 64, 32>}, {pipeline_mode = #tpu.pipeline_mode<synchronous>, transform_indices = @transform_2, window_bounds = array<i64: 32, 32>}, {pipeline_mode = #tpu.pipeline_mode<synchronous>, transform_indices = @transform_3, window_bounds = array<i64: 32, 32>}, {pipeline_mode = #tpu.pipeline_mode<synchronous>, transform_indices = @transform_4, window_bounds = array<i64: 32, 32>}, {pipeline_mode = #tpu.pipeline_mode<synchronous>, transform_indices = @transform_5, window_bounds = array<i64: 32, 32>}, {pipeline_mode = #tpu.pipeline_mode<synchronous>, transform_indices = @transform_6, window_bounds = array<i64: 32, 32>}, {pipeline_mode = #tpu.pipeline_mode<synchronous>, transform_indices = @transform_7, window_bounds = array<i64: 32, 32>}, {pipeline_mode = #tpu.pipeline_mode<synchronous>, transform_indices = @transform_8, window_bounds = array<i64: 32, 6>}, {pipeline_mode = #tpu.pipeline_mode<synchronous>, transform_indices = @transform_9, window_bounds = array<i64: 8, 32>}, {transform_indices = @transform_10, window_bounds = array<i64: 8, 6>}]} {
    %c0 = arith.constant 0 : index
    %c0_0 = arith.constant 0 : index
    %0 = vector.load %arg1[%c0, %c0_0] : memref<8x64xf32, #tpu.memory_space<vmem>>, vector<8x64xf32>
    %c0_1 = arith.constant 0 : index
    %c0_2 = arith.constant 0 : index
    %1 = vector.load %arg2[%c0_1, %c0_2] : memref<64x32xf32, #tpu.memory_space<vmem>>, vector<64x32xf32>
    %cst = arith.constant dense<0.000000e+00> : vector<8x32xf32>
    %2 = tpu.matmul %0, %1, %cst {dimension_numbers = #tpu.dot_dimension_numbers<[1], [0], [0], [1], [0, 0, 1, 1], [], []>} : vector<8x64xf32>, vector<64x32xf32>, vector<8x32xf32> -> vector<8x32xf32>
    %c0_3 = arith.constant 0 : index
    %c0_4 = arith.constant 0 : index
    %3 = vector.load %arg10[%c0_3, %c0_4] : memref<8x32xf32, #tpu.memory_space<vmem>>, vector<1x32xf32>
    %4 = vector.broadcast %3 : vector<1x32xf32> to vector<8x32xf32>
    %5 = arith.addf %2, %4 : vector<8x32xf32>
    %cst_5 = arith.constant 0.000000e+00 : f32
    %6 = vector.broadcast %cst_5 : f32 to vector<8x32xf32>
    %7 = arith.maximumf %5, %6 : vector<8x32xf32>
    %c0_6 = arith.constant 0 : index
    %c0_7 = arith.constant 0 : index
    %8 = vector.load %arg3[%c0_6, %c0_7] : memref<32x32xf32, #tpu.memory_space<vmem>>, vector<32x32xf32>
    %cst_8 = arith.constant dense<0.000000e+00> : vector<8x32xf32>
    %9 = tpu.matmul %7, %8, %cst_8 {dimension_numbers = #tpu.dot_dimension_numbers<[1], [0], [0], [1], [0, 0, 1, 1], [], []>} : vector<8x32xf32>, vector<32x32xf32>, vector<8x32xf32> -> vector<8x32xf32>
    %c1 = arith.constant 1 : index
    %c0_9 = arith.constant 0 : index
    %10 = vector.load %arg10[%c1, %c0_9] : memref<8x32xf32, #tpu.memory_space<vmem>>, vector<1x32xf32>
    %11 = vector.broadcast %10 : vector<1x32xf32> to vector<8x32xf32>
    %12 = arith.addf %9, %11 : vector<8x32xf32>
    %cst_10 = arith.constant 0.000000e+00 : f32
    %13 = vector.broadcast %cst_10 : f32 to vector<8x32xf32>
    %14 = arith.maximumf %12, %13 : vector<8x32xf32>
    %c0_11 = arith.constant 0 : index
    %c0_12 = arith.constant 0 : index
    %15 = vector.load %arg4[%c0_11, %c0_12] : memref<32x32xf32, #tpu.memory_space<vmem>>, vector<32x32xf32>
    %cst_13 = arith.constant dense<0.000000e+00> : vector<8x32xf32>
    %16 = tpu.matmul %14, %15, %cst_13 {dimension_numbers = #tpu.dot_dimension_numbers<[1], [0], [0], [1], [0, 0, 1, 1], [], []>} : vector<8x32xf32>, vector<32x32xf32>, vector<8x32xf32> -> vector<8x32xf32>
    %c2 = arith.constant 2 : index
    %c0_14 = arith.constant 0 : index
    %17 = vector.load %arg10[%c2, %c0_14] : memref<8x32xf32, #tpu.memory_space<vmem>>, vector<1x32xf32>
    %18 = vector.broadcast %17 : vector<1x32xf32> to vector<8x32xf32>
    %19 = arith.addf %16, %18 : vector<8x32xf32>
    %cst_15 = arith.constant 0.000000e+00 : f32
    %20 = vector.broadcast %cst_15 : f32 to vector<8x32xf32>
    %21 = arith.maximumf %19, %20 : vector<8x32xf32>
    %c0_16 = arith.constant 0 : index
    %c0_17 = arith.constant 0 : index
    %22 = vector.load %arg5[%c0_16, %c0_17] : memref<32x32xf32, #tpu.memory_space<vmem>>, vector<32x32xf32>
    %cst_18 = arith.constant dense<0.000000e+00> : vector<8x32xf32>
    %23 = tpu.matmul %21, %22, %cst_18 {dimension_numbers = #tpu.dot_dimension_numbers<[1], [0], [0], [1], [0, 0, 1, 1], [], []>} : vector<8x32xf32>, vector<32x32xf32>, vector<8x32xf32> -> vector<8x32xf32>
    %c3 = arith.constant 3 : index
    %c0_19 = arith.constant 0 : index
    %24 = vector.load %arg10[%c3, %c0_19] : memref<8x32xf32, #tpu.memory_space<vmem>>, vector<1x32xf32>
    %25 = vector.broadcast %24 : vector<1x32xf32> to vector<8x32xf32>
    %26 = arith.addf %23, %25 : vector<8x32xf32>
    %cst_20 = arith.constant 0.000000e+00 : f32
    %27 = vector.broadcast %cst_20 : f32 to vector<8x32xf32>
    %28 = arith.maximumf %26, %27 : vector<8x32xf32>
    %c0_21 = arith.constant 0 : index
    %c0_22 = arith.constant 0 : index
    %29 = vector.load %arg6[%c0_21, %c0_22] : memref<32x32xf32, #tpu.memory_space<vmem>>, vector<32x32xf32>
    %cst_23 = arith.constant dense<0.000000e+00> : vector<8x32xf32>
    %30 = tpu.matmul %28, %29, %cst_23 {dimension_numbers = #tpu.dot_dimension_numbers<[1], [0], [0], [1], [0, 0, 1, 1], [], []>} : vector<8x32xf32>, vector<32x32xf32>, vector<8x32xf32> -> vector<8x32xf32>
    %c4 = arith.constant 4 : index
    %c0_24 = arith.constant 0 : index
    %31 = vector.load %arg10[%c4, %c0_24] : memref<8x32xf32, #tpu.memory_space<vmem>>, vector<1x32xf32>
    %32 = vector.broadcast %31 : vector<1x32xf32> to vector<8x32xf32>
    %33 = arith.addf %30, %32 : vector<8x32xf32>
    %cst_25 = arith.constant 0.000000e+00 : f32
    %34 = vector.broadcast %cst_25 : f32 to vector<8x32xf32>
    %35 = arith.maximumf %33, %34 : vector<8x32xf32>
    %c0_26 = arith.constant 0 : index
    %c0_27 = arith.constant 0 : index
    %36 = vector.load %arg7[%c0_26, %c0_27] : memref<32x32xf32, #tpu.memory_space<vmem>>, vector<32x32xf32>
    %cst_28 = arith.constant dense<0.000000e+00> : vector<8x32xf32>
    %37 = tpu.matmul %35, %36, %cst_28 {dimension_numbers = #tpu.dot_dimension_numbers<[1], [0], [0], [1], [0, 0, 1, 1], [], []>} : vector<8x32xf32>, vector<32x32xf32>, vector<8x32xf32> -> vector<8x32xf32>
    %c5 = arith.constant 5 : index
    %c0_29 = arith.constant 0 : index
    %38 = vector.load %arg10[%c5, %c0_29] : memref<8x32xf32, #tpu.memory_space<vmem>>, vector<1x32xf32>
    %39 = vector.broadcast %38 : vector<1x32xf32> to vector<8x32xf32>
    %40 = arith.addf %37, %39 : vector<8x32xf32>
    %cst_30 = arith.constant 0.000000e+00 : f32
    %41 = vector.broadcast %cst_30 : f32 to vector<8x32xf32>
    %42 = arith.maximumf %40, %41 : vector<8x32xf32>
    %c0_31 = arith.constant 0 : index
    %c0_32 = arith.constant 0 : index
    %43 = vector.load %arg8[%c0_31, %c0_32] : memref<32x32xf32, #tpu.memory_space<vmem>>, vector<32x32xf32>
    %cst_33 = arith.constant dense<0.000000e+00> : vector<8x32xf32>
    %44 = tpu.matmul %42, %43, %cst_33 {dimension_numbers = #tpu.dot_dimension_numbers<[1], [0], [0], [1], [0, 0, 1, 1], [], []>} : vector<8x32xf32>, vector<32x32xf32>, vector<8x32xf32> -> vector<8x32xf32>
    %c6 = arith.constant 6 : index
    %c0_34 = arith.constant 0 : index
    %45 = vector.load %arg10[%c6, %c0_34] : memref<8x32xf32, #tpu.memory_space<vmem>>, vector<1x32xf32>
    %46 = vector.broadcast %45 : vector<1x32xf32> to vector<8x32xf32>
    %47 = arith.addf %44, %46 : vector<8x32xf32>
    %cst_35 = arith.constant 0.000000e+00 : f32
    %48 = vector.broadcast %cst_35 : f32 to vector<8x32xf32>
    %49 = arith.maximumf %47, %48 : vector<8x32xf32>
    %c0_36 = arith.constant 0 : index
    %c0_37 = arith.constant 0 : index
    %50 = vector.load %arg9[%c0_36, %c0_37] : memref<32x6xf32, #tpu.memory_space<vmem>>, vector<32x6xf32>
    %cst_38 = arith.constant dense<0.000000e+00> : vector<8x6xf32>
    %51 = tpu.matmul %49, %50, %cst_38 {dimension_numbers = #tpu.dot_dimension_numbers<[1], [0], [0], [1], [0, 0, 1, 1], [], []>} : vector<8x32xf32>, vector<32x6xf32>, vector<8x6xf32> -> vector<8x6xf32>
    %c7 = arith.constant 7 : index
    %c0_39 = arith.constant 0 : index
    %52 = vector.load %arg10[%c7, %c0_39] : memref<8x32xf32, #tpu.memory_space<vmem>>, vector<1x6xf32>
    %53 = vector.broadcast %52 : vector<1x6xf32> to vector<8x6xf32>
    %54 = arith.addf %51, %53 : vector<8x6xf32>
    %55 = math.tanh %54 : vector<8x6xf32>
    %56 = math.tanh %55 : vector<8x6xf32>
    %c0_40 = arith.constant 0 : index
    %c0_41 = arith.constant 0 : index
    %57 = vector.load %arg11[%c0_40, %c0_41] : memref<8x6xf32, #tpu.memory_space<vmem>>, vector<8x6xf32>
    tpu.vector_store %arg11[%c0_40, %c0_41], %56 {strides = array<i32>} : memref<8x6xf32, #tpu.memory_space<vmem>>, vector<8x6xf32>,
    return
  }
  func.func @transform_0(%arg0: i32) -> (i32, i32) {
    %c0_i32 = arith.constant 0 : i32
    %c0_i32_0 = arith.constant 0 : i32
    return %arg0, %c0_i32 : i32, i32
  }
  func.func @transform_1(%arg0: i32) -> (i32, i32) {
    %c0_i32 = arith.constant 0 : i32
    %c0_i32_0 = arith.constant 0 : i32
    %c0_i32_1 = arith.constant 0 : i32
    return %c0_i32, %c0_i32_0 : i32, i32
  }
  func.func @transform_2(%arg0: i32) -> (i32, i32) {
    %c0_i32 = arith.constant 0 : i32
    %c0_i32_0 = arith.constant 0 : i32
    %c0_i32_1 = arith.constant 0 : i32
    return %c0_i32, %c0_i32_0 : i32, i32
  }
  func.func @transform_3(%arg0: i32) -> (i32, i32) {
    %c0_i32 = arith.constant 0 : i32
    %c0_i32_0 = arith.constant 0 : i32
    %c0_i32_1 = arith.constant 0 : i32
    return %c0_i32, %c0_i32_0 : i32, i32
  }
  func.func @transform_4(%arg0: i32) -> (i32, i32) {
    %c0_i32 = arith.constant 0 : i32
    %c0_i32_0 = arith.constant 0 : i32
    %c0_i32_1 = arith.constant 0 : i32
    return %c0_i32, %c0_i32_0 : i32, i32
  }
  func.func @transform_5(%arg0: i32) -> (i32, i32) {
    %c0_i32 = arith.constant 0 : i32
    %c0_i32_0 = arith.constant 0 : i32
    %c0_i32_1 = arith.constant 0 : i32
    return %c0_i32, %c0_i32_0 : i32, i32
  }
  func.func @transform_6(%arg0: i32) -> (i32, i32) {
    %c0_i32 = arith.constant 0 : i32
    %c0_i32_0 = arith.constant 0 : i32
    %c0_i32_1 = arith.constant 0 : i32
    return %c0_i32, %c0_i32_0 : i32, i32
  }
  func.func @transform_7(%arg0: i32) -> (i32, i32) {
    %c0_i32 = arith.constant 0 : i32
    %c0_i32_0 = arith.constant 0 : i32
    %c0_i32_1 = arith.constant 0 : i32
    return %c0_i32, %c0_i32_0 : i32, i32
  }
  func.func @transform_8(%arg0: i32) -> (i32, i32) {
    %c0_i32 = arith.constant 0 : i32
    %c0_i32_0 = arith.constant 0 : i32
    %c0_i32_1 = arith.constant 0 : i32
    return %c0_i32, %c0_i32_0 : i32, i32
  }
  func.func @transform_9(%arg0: i32) -> (i32, i32) {
    %c0_i32 = arith.constant 0 : i32
    %c0_i32_0 = arith.constant 0 : i32
    %c0_i32_1 = arith.constant 0 : i32
    return %c0_i32, %c0_i32_0 : i32, i32
  }
  func.func @transform_10(%arg0: i32) -> (i32, i32) {
    %c0_i32 = arith.constant 0 : i32
    %c0_i32_0 = arith.constant 0 : i32
    return %arg0, %c0_i32 : i32, i32
  }
}

</mosaic_0001>

<llo_original>
// kernel: tpu_custom_call.1
$region0: #{tpu_custom_call.1}
  #allocation0 [shape = 'u32[]', space=smem, size = 0x4, offset = 0x4, fixed_abs, tag = 'smem constant byte address 0x4 - core index']
  #allocation1 [shape = 'u32[144,128]{1,0:T(1,128)}', space=vmem, size = 0x12000, scoped, tag = 'internal scratch']
  %s0 = inlined_call_operand.hbm [shape: f32[8,64], index: 0, kind: input, shape index: {}]
  %s1 = inlined_call_operand.vmem [shape: f32[64,32], index: 1, kind: input, shape index: {}]
  %s2 = inlined_call_operand.vmem [shape: f32[32,32], index: 2, kind: input, shape index: {}]
  %s3 = inlined_call_operand.vmem [shape: f32[32,32], index: 3, kind: input, shape index: {}]
  %s4 = inlined_call_operand.vmem [shape: f32[32,32], index: 4, kind: input, shape index: {}]
  %s5 = inlined_call_operand.hbm [shape: f32[32,32], index: 5, kind: input, shape index: {}]
  %s6 = inlined_call_operand.hbm [shape: f32[32,32], index: 6, kind: input, shape index: {}]
  %s7 = inlined_call_operand.vmem [shape: f32[32,32], index: 7, kind: input, shape index: {}]
  %s8 = inlined_call_operand.vmem [shape: f32[32,6], index: 8, kind: input, shape index: {}]
  %s9 = inlined_call_operand.vmem [shape: f32[8,32], index: 9, kind: input, shape index: {}]
  %s10 = inlined_call_operand.hbm [shape: f32[8,6], index: 10, kind: output, shape index: {}]
  %s11 = sld [smem:[#allocation0]]
  $region62: #{tpu_custom_call.1} parent=0
    _
  %s13 = ssub.s32 1, %s11
  %s14 = scalar_select 0, %s13, %s11
  $region1: #{tpu_custom_call.1} parent=0
    #allocation2 [shape = 'u8[4096]{0}', space=vmem, size = 0x1000, scoped, tag = 'input window, operand 0, single buffered']
    #allocation3 [shape = 's32[1]{0}', space=sflag, size = 0x4, scoped, tag = 'scoped memory for tpu_custom_call.1']
    #allocation4 [shape = 's32[1]{0}', space=sflag, size = 0x4, scoped, tag = 'scoped memory for tpu_custom_call.1']
    #allocation5 [shape = 'u8[16384]{0}', space=vmem, size = 0x4000, scoped, tag = 'input window, operand 5, single buffered']
    #allocation6 [shape = 's32[1]{0}', space=sflag, size = 0x4, scoped, tag = 'scoped memory for tpu_custom_call.1']
    #allocation7 [shape = 'u8[16384]{0}', space=vmem, size = 0x4000, scoped, tag = 'input window, operand 6, single buffered']
    #allocation8 [shape = 'u8[4096]{0}', space=vmem, size = 0x1000, scoped, tag = 'output window, operand 0, single buffered']
    %15 = vsyncpa [#allocation3], 0
    %16 = vsyncpa [#allocation6], 0
    %17 = vsyncpa [#allocation4], 0
    // Predicated region
    $region2: #{tpu_custom_call.1} parent=1 // pred_check
      _
    $region3: #{tpu_custom_call.1} parent=1 // pred_check_branch
      %19 = sbr.rel (0) target = $region5
    $region4: #{tpu_custom_call.1} parent=1 // pred_region
      %s21 = ssub.s32 128, 128
      %22 = vsyncadd [#allocation3], %s21
      %s24 = sshll.u32 [#allocation2], 4
      %s25 = int_to_ptr.vmem [resolvable:$true] %s24
      %27 = dma.hbm_to_vmem [thread:$0]  %s0, 128, %s25, [#allocation3]
    $region5: #{tpu_custom_call.1} parent=1 // pred_fallthru
      _
    // Predicated region
    $region6: #{tpu_custom_call.1} parent=1 // pred_check
      _
    $region7: #{tpu_custom_call.1} parent=1 // pred_check_branch
      %29 = sbr.rel (0) target = $region9
    $region8: #{tpu_custom_call.1} parent=1 // pred_region
      _
    $region9: #{tpu_custom_call.1} parent=1 // pred_fallthru
      _
    // Predicated region
    $region10: #{tpu_custom_call.1} parent=1 // pred_check
      _
    $region11: #{tpu_custom_call.1} parent=1 // pred_check_branch
      %31 = sbr.rel (0) target = $region13
    $region12: #{tpu_custom_call.1} parent=1 // pred_region
      _
    $region13: #{tpu_custom_call.1} parent=1 // pred_fallthru
      _
    // Predicated region
    $region14: #{tpu_custom_call.1} parent=1 // pred_check
      _
    $region15: #{tpu_custom_call.1} parent=1 // pred_check_branch
      %33 = sbr.rel (0) target = $region17
    $region16: #{tpu_custom_call.1} parent=1 // pred_region
      _
    $region17: #{tpu_custom_call.1} parent=1 // pred_fallthru
      _
    // Predicated region
    $region18: #{tpu_custom_call.1} parent=1 // pred_check
      _
    $region19: #{tpu_custom_call.1} parent=1 // pred_check_branch
      %35 = sbr.rel (0) target = $region21
    $region20: #{tpu_custom_call.1} parent=1 // pred_region
      _
    $region21: #{tpu_custom_call.1} parent=1 // pred_fallthru
      _
    // Predicated region
    $region22: #{tpu_custom_call.1} parent=1 // pred_check
      _
    $region23: #{tpu_custom_call.1} parent=1 // pred_check_branch
      %37 = sbr.rel (0) target = $region25
    $region24: #{tpu_custom_call.1} parent=1 // pred_region
      %s39 = ssub.s32 512, 512
      %40 = vsyncadd [#allocation6], %s39
      %s41 = sshll.u32 [#allocation5], 4
      %s42 = int_to_ptr.vmem [resolvable:$true] %s41
      %47 = dma.hbm_to_vmem [thread:$0]  %s5, 512, %s42, [#allocation6], 128, 128, 8
    $region25: #{tpu_custom_call.1} parent=1 // pred_fallthru
      _
    // Predicated region
    $region26: #{tpu_custom_call.1} parent=1 // pred_check
      _
    $region27: #{tpu_custom_call.1} parent=1 // pred_check_branch
      %49 = sbr.rel (0) target = $region29
    $region28: #{tpu_custom_call.1} parent=1 // pred_region
      %s51 = ssub.s32 512, 512
      %52 = vsyncadd [#allocation6], %s51
      %s53 = sshll.u32 [#allocation7], 4
      %s54 = int_to_ptr.vmem [resolvable:$true] %s53
      %59 = dma.hbm_to_vmem [thread:$0]  %s6, 512, %s54, [#allocation6], 128, 128, 8
    $region29: #{tpu_custom_call.1} parent=1 // pred_fallthru
      _
    // Predicated region
    $region30: #{tpu_custom_call.1} parent=1 // pred_check
      _
    $region31: #{tpu_custom_call.1} parent=1 // pred_check_branch
      %61 = sbr.rel (0) target = $region33
    $region32: #{tpu_custom_call.1} parent=1 // pred_region
      _
    $region33: #{tpu_custom_call.1} parent=1 // pred_fallthru
      _
    // Predicated region
    $region34: #{tpu_custom_call.1} parent=1 // pred_check
      _
    $region35: #{tpu_custom_call.1} parent=1 // pred_check_branch
      %63 = sbr.rel (0) target = $region37
    $region36: #{tpu_custom_call.1} parent=1 // pred_region
      _
    $region37: #{tpu_custom_call.1} parent=1 // pred_fallthru
      _
    // Predicated region
    $region38: #{tpu_custom_call.1} parent=1 // pred_check
      _
    $region39: #{tpu_custom_call.1} parent=1 // pred_check_branch
      %65 = sbr.rel (0) target = $region41
    $region40: #{tpu_custom_call.1} parent=1 // pred_region
      _
    $region41: #{tpu_custom_call.1} parent=1 // pred_fallthru
      _
    // Predicated region
    $region42: #{tpu_custom_call.1} parent=1 // pred_check
      _
    $region43: #{tpu_custom_call.1} parent=1 // pred_check_branch
      %67 = sbr.rel (0) target = $region45
    $region44: #{tpu_custom_call.1} parent=1 // pred_region
      %68 = dma.done [#allocation3], 128
    $region45: #{tpu_custom_call.1} parent=1 // pred_fallthru
      _
    // Predicated region
    $region46: #{tpu_custom_call.1} parent=1 // pred_check
      _
    $region47: #{tpu_custom_call.1} parent=1 // pred_check_branch
      %70 = sbr.rel (0) target = $region49
    $region48: #{tpu_custom_call.1} parent=1 // pred_region
      %71 = dma.done [#allocation6], 512
    $region49: #{tpu_custom_call.1} parent=1 // pred_fallthru
      _
    // Predicated region
    $region50: #{tpu_custom_call.1} parent=1 // pred_check
      _
    $region51: #{tpu_custom_call.1} parent=1 // pred_check_branch
      %73 = sbr.rel (0) target = $region53
    $region52: #{tpu_custom_call.1} parent=1 // pred_region
      %74 = dma.done [#allocation6], 512
    $region53: #{tpu_custom_call.1} parent=1 // pred_fallthru
      _
    %v75 = vld [vmem:[#allocation2] sm:$0xff]
    %v76 = vld [vmem:[%s1] sm:$0xff]
    %v77 = vld [vmem:[%s1 + $0x8] sm:$0xff]
    %v78 = vld [vmem:[%s1 + $0x10] sm:$0xff]
    %v79 = vld [vmem:[%s1 + $0x18] sm:$0xff]
    %v80 = vld [vmem:[%s1 + $0x20] sm:$0xff]
    %v81 = vld [vmem:[%s1 + $0x28] sm:$0xff]
    %v82 = vld [vmem:[%s1 + $0x30] sm:$0xff]
    %v83 = vld [vmem:[%s1 + $0x38] sm:$0xff]
    %v84 = vld [vmem:[%s9] sm:$0x1]
    %v85 = vlaneseq
    %v86 = vshrl.u32 %v85, 7
    %v87 = vsub.s32 0, %v86
    %v88 = vrot.slane %v84, %v87
    %vm89 = vcmask 523264
    %v91 = vsel %vm89, %v75, 0
    %93 = vmatprep.subr.mxu0 0.0
    %94 = vmatpush1.msra.mxu0 %v76
    %95 = vmatprep.subr.mxu0 0.0
    %96 = vmatpush1.msra.mxu0 %v77
    %97 = vmatprep.subr.mxu0 0.0
    %98 = vmatpush1.msra.mxu0 %v78
    %99 = vmatprep.subr.mxu0 0.0
    %100 = vmatpush1.msra.mxu0 %v79
    %101 = vmatprep.subr.mxu0 0.0
    %102 = vmatpush1.msra.mxu0 %v80
    %103 = vmatprep.subr.mxu0 0.0
    %104 = vmatpush1.msra.mxu0 %v81
    %105 = vmatprep.subr.mxu0 0.0
    %106 = vmatpush1.msra.mxu0 %v82
    %107 = vmatprep.subr.mxu0 0.0
    %108 = vmatpush1.msra.mxu0 %v83
    %109 = vmatprep.subr.mxu0 0.0
    %110 = vmatpush1.msra.mxu0 0.0
    %111 = vmatprep.subr.mxu0 0.0
    %112 = vmatpush1.msra.mxu0 0.0
    %113 = vmatprep.subr.mxu0 0.0
    %114 = vmatpush1.msra.mxu0 0.0
    %115 = vmatprep.subr.mxu0 0.0
    %116 = vmatpush1.msra.mxu0 0.0
    %117 = vmatprep.subr.mxu0 0.0
    %118 = vmatpush1.msra.mxu0 0.0
    %119 = vmatprep.subr.mxu0 0.0
    %120 = vmatpush1.msra.mxu0 0.0
    %121 = vmatprep.subr.mxu0 0.0
    %122 = vmatpush1.msra.mxu0 0.0
    %123 = vmatprep.subr.mxu0 0.0
    %124 = vmatpush1.msra.mxu0 0.0
    %125 = vmatprep.subr.mxu0 0.0
    %126 = vmatpush1.msra.mxu0 0.0
    %127 = vmatprep.subr.mxu0 0.0
    %128 = vmatpush1.msra.mxu0 0.0
    %129 = vmatprep.subr.mxu0 0.0
    %130 = vmatpush1.msra.mxu0 0.0
    %131 = vmatprep.subr.mxu0 0.0
    %132 = vmatpush1.msra.mxu0 0.0
    %133 = vmatprep.subr.mxu0 0.0
    %134 = vmatpush1.msra.mxu0 0.0
    %135 = vmatprep.subr.mxu0 0.0
    %136 = vmatpush1.msra.mxu0 0.0
    %137 = vmatprep.subr.mxu0 0.0
    %138 = vmatpush1.msra.mxu0 0.0
    %139 = vmatprep.subr.mxu0 0.0
    %140 = vmatpush1.msra.mxu0 0.0
    %141 = vmatprep.subr.mxu0 0.0
    %142 = vmatpush1.msra.mxu0 0.0
    %143 = vmatprep.subr.mxu0 0.0
    %144 = vmatpush1.msra.mxu0 0.0
    %145 = vmatprep.subr.mxu0 0.0
    %146 = vmatpush1.msra.mxu0 0.0
    %147 = vmatprep.subr.mxu0 0.0
    %148 = vmatpush1.msra.mxu0 0.0
    %149 = vmatprep.subr.mxu0 0.0
    %150 = vmatpush1.msra.mxu0 0.0
    %151 = vmatprep.subr.mxu0 0.0
    %152 = vmatpush1.msra.mxu0 0.0
    %153 = vmatprep.subr.mxu0 0.0
    %154 = vmatpush1.msra.mxu0 0.0
    %155 = vmatprep.subr.mxu0 0.0
    %156 = vmatpush1.msra.mxu0 0.0
    %157 = vmatprep.mubr.f32.mxu0 0.0
    %158 = vmatmul.mubr.f32.gmra.mrb[0].mxu0 %v91
    %v159 = vpop.f32.mrb[0].mxu0
    %v160 = vadd.f32 %v88, %v159
    %v161 = vpop.f32.mrb[0].mxu0
    %162 = vdwg.mxu0
    %v163 = vmax.f32 %v160, 0.0
    %v164 = vld [vmem:[%s2] sm:$0xff]
    %v165 = vld [vmem:[%s2 + $0x8] sm:$0xff]
    %v166 = vld [vmem:[%s2 + $0x10] sm:$0xff]
    %v167 = vld [vmem:[%s2 + $0x18] sm:$0xff]
    %v168 = vld [vmem:[%s9 + $0x1] sm:$0x1]
    %v169 = vlaneseq
    %v170 = vshrl.u32 %v169, 7
    %v171 = vsub.s32 0, %v170
    %v172 = vrot.slane %v168, %v171
    %vm173 = vcmask 261120
    %v175 = vsel %vm173, %v163, 0
    %177 = vmatprep.subr.mxu0 0.0
    %178 = vmatpush1.msra.mxu0 %v164
    %179 = vmatprep.subr.mxu0 0.0
    %180 = vmatpush1.msra.mxu0 %v165
    %181 = vmatprep.subr.mxu0 0.0
    %182 = vmatpush1.msra.mxu0 %v166
    %183 = vmatprep.subr.mxu0 0.0
    %184 = vmatpush1.msra.mxu0 %v167
    %185 = vmatprep.subr.mxu0 0.0
    %186 = vmatpush1.msra.mxu0 0.0
    %187 = vmatprep.subr.mxu0 0.0
    %188 = vmatpush1.msra.mxu0 0.0
    %189 = vmatprep.subr.mxu0 0.0
    %190 = vmatpush1.msra.mxu0 0.0
    %191 = vmatprep.subr.mxu0 0.0
    %192 = vmatpush1.msra.mxu0 0.0
    %193 = vmatprep.subr.mxu0 0.0
    %194 = vmatpush1.msra.mxu0 0.0
    %195 = vmatprep.subr.mxu0 0.0
    %196 = vmatpush1.msra.mxu0 0.0
    %197 = vmatprep.subr.mxu0 0.0
    %198 = vmatpush1.msra.mxu0 0.0
    %199 = vmatprep.subr.mxu0 0.0
    %200 = vmatpush1.msra.mxu0 0.0
    %201 = vmatprep.subr.mxu0 0.0
    %202 = vmatpush1.msra.mxu0 0.0
    %203 = vmatprep.subr.mxu0 0.0
    %204 = vmatpush1.msra.mxu0 0.0
    %205 = vmatprep.subr.mxu0 0.0
    %206 = vmatpush1.msra.mxu0 0.0
    %207 = vmatprep.subr.mxu0 0.0
    %208 = vmatpush1.msra.mxu0 0.0
    %209 = vmatprep.subr.mxu0 0.0
    %210 = vmatpush1.msra.mxu0 0.0
    %211 = vmatprep.subr.mxu0 0.0
    %212 = vmatpush1.msra.mxu0 0.0
    %213 = vmatprep.subr.mxu0 0.0
    %214 = vmatpush1.msra.mxu0 0.0
    %215 = vmatprep.subr.mxu0 0.0
    %216 = vmatpush1.msra.mxu0 0.0
    %217 = vmatprep.subr.mxu0 0.0
    %218 = vmatpush1.msra.mxu0 0.0
    %219 = vmatprep.subr.mxu0 0.0
    %220 = vmatpush1.msra.mxu0 0.0
    %221 = vmatprep.subr.mxu0 0.0
    %222 = vmatpush1.msra.mxu0 0.0
    %223 = vmatprep.subr.mxu0 0.0
    %224 = vmatpush1.msra.mxu0 0.0
    %225 = vmatprep.subr.mxu0 0.0
    %226 = vmatpush1.msra.mxu0 0.0
    %227 = vmatprep.subr.mxu0 0.0
    %228 = vmatpush1.msra.mxu0 0.0
    %229 = vmatprep.subr.mxu0 0.0
    %230 = vmatpush1.msra.mxu0 0.0
    %231 = vmatprep.subr.mxu0 0.0
    %232 = vmatpush1.msra.mxu0 0.0
    %233 = vmatprep.subr.mxu0 0.0
    %234 = vmatpush1.msra.mxu0 0.0
    %235 = vmatprep.subr.mxu0 0.0
    %236 = vmatpush1.msra.mxu0 0.0
    %237 = vmatprep.subr.mxu0 0.0
    %238 = vmatpush1.msra.mxu0 0.0
    %239 = vmatprep.subr.mxu0 0.0
    %240 = vmatpush1.msra.mxu0 0.0
    %241 = vmatprep.mubr.f32.mxu0 0.0
    %242 = vmatmul.mubr.f32.gmra.mrb[0].mxu0 %v175
    %v243 = vpop.f32.mrb[0].mxu0
    %v244 = vadd.f32 %v172, %v243
    %v245 = vpop.f32.mrb[0].mxu0
    %246 = vdwg.mxu0
    %v247 = vmax.f32 %v244, 0.0
    %v248 = vld [vmem:[%s3] sm:$0xff]
    %v249 = vld [vmem:[%s3 + $0x8] sm:$0xff]
    %v250 = vld [vmem:[%s3 + $0x10] sm:$0xff]
    %v251 = vld [vmem:[%s3 + $0x18] sm:$0xff]
    %v252 = vld [vmem:[%s9 + $0x2] sm:$0x1]
    %v253 = vlaneseq
    %v254 = vshrl.u32 %v253, 7
    %v255 = vsub.s32 0, %v254
    %v256 = vrot.slane %v252, %v255
    %v258 = vsel %vm173, %v247, 0
    %260 = vmatprep.subr.mxu0 0.0
    %261 = vmatpush1.msra.mxu0 %v248
    %262 = vmatprep.subr.mxu0 0.0
    %263 = vmatpush1.msra.mxu0 %v249
    %264 = vmatprep.subr.mxu0 0.0
    %265 = vmatpush1.msra.mxu0 %v250
    %266 = vmatprep.subr.mxu0 0.0
    %267 = vmatpush1.msra.mxu0 %v251
    %268 = vmatprep.subr.mxu0 0.0
    %269 = vmatpush1.msra.mxu0 0.0
    %270 = vmatprep.subr.mxu0 0.0
    %271 = vmatpush1.msra.mxu0 0.0
    %272 = vmatprep.subr.mxu0 0.0
    %273 = vmatpush1.msra.mxu0 0.0
    %274 = vmatprep.subr.mxu0 0.0
    %275 = vmatpush1.msra.mxu0 0.0
    %276 = vmatprep.subr.mxu0 0.0
    %277 = vmatpush1.msra.mxu0 0.0
    %278 = vmatprep.subr.mxu0 0.0
    %279 = vmatpush1.msra.mxu0 0.0
    %280 = vmatprep.subr.mxu0 0.0
    %281 = vmatpush1.msra.mxu0 0.0
    %282 = vmatprep.subr.mxu0 0.0
    %283 = vmatpush1.msra.mxu0 0.0
    %284 = vmatprep.subr.mxu0 0.0
    %285 = vmatpush1.msra.mxu0 0.0
    %286 = vmatprep.subr.mxu0 0.0
    %287 = vmatpush1.msra.mxu0 0.0
    %288 = vmatprep.subr.mxu0 0.0
    %289 = vmatpush1.msra.mxu0 0.0
    %290 = vmatprep.subr.mxu0 0.0
    %291 = vmatpush1.msra.mxu0 0.0
    %292 = vmatprep.subr.mxu0 0.0
    %293 = vmatpush1.msra.mxu0 0.0
    %294 = vmatprep.subr.mxu0 0.0
    %295 = vmatpush1.msra.mxu0 0.0
    %296 = vmatprep.subr.mxu0 0.0
    %297 = vmatpush1.msra.mxu0 0.0
    %298 = vmatprep.subr.mxu0 0.0
    %299 = vmatpush1.msra.mxu0 0.0
    %300 = vmatprep.subr.mxu0 0.0
    %301 = vmatpush1.msra.mxu0 0.0
    %302 = vmatprep.subr.mxu0 0.0
    %303 = vmatpush1.msra.mxu0 0.0
    %304 = vmatprep.subr.mxu0 0.0
    %305 = vmatpush1.msra.mxu0 0.0
    %306 = vmatprep.subr.mxu0 0.0
    %307 = vmatpush1.msra.mxu0 0.0
    %308 = vmatprep.subr.mxu0 0.0
    %309 = vmatpush1.msra.mxu0 0.0
    %310 = vmatprep.subr.mxu0 0.0
    %311 = vmatpush1.msra.mxu0 0.0
    %312 = vmatprep.subr.mxu0 0.0
    %313 = vmatpush1.msra.mxu0 0.0
    %314 = vmatprep.subr.mxu0 0.0
    %315 = vmatpush1.msra.mxu0 0.0
    %316 = vmatprep.subr.mxu0 0.0
    %317 = vmatpush1.msra.mxu0 0.0
    %318 = vmatprep.subr.mxu0 0.0
    %319 = vmatpush1.msra.mxu0 0.0
    %320 = vmatprep.subr.mxu0 0.0
    %321 = vmatpush1.msra.mxu0 0.0
    %322 = vmatprep.subr.mxu0 0.0
    %323 = vmatpush1.msra.mxu0 0.0
    %324 = vmatprep.mubr.f32.mxu0 0.0
    %325 = vmatmul.mubr.f32.gmra.mrb[0].mxu0 %v258
    %v326 = vpop.f32.mrb[0].mxu0
    %v327 = vadd.f32 %v256, %v326
    %v328 = vpop.f32.mrb[0].mxu0
    %329 = vdwg.mxu0
    %v330 = vmax.f32 %v327, 0.0
    %v331 = vld [vmem:[%s4] sm:$0xff]
    %v332 = vld [vmem:[%s4 + $0x8] sm:$0xff]
    %v333 = vld [vmem:[%s4 + $0x10] sm:$0xff]
    %v334 = vld [vmem:[%s4 + $0x18] sm:$0xff]
    %v335 = vld [vmem:[%s9 + $0x3] sm:$0x1]
    %v336 = vlaneseq
    %v337 = vshrl.u32 %v336, 7
    %v338 = vsub.s32 0, %v337
    %v339 = vrot.slane %v335, %v338
    %v341 = vsel %vm173, %v330, 0
    %343 = vmatprep.subr.mxu0 0.0
    %344 = vmatpush1.msra.mxu0 %v331
    %345 = vmatprep.subr.mxu0 0.0
    %346 = vmatpush1.msra.mxu0 %v332
    %347 = vmatprep.subr.mxu0 0.0
    %348 = vmatpush1.msra.mxu0 %v333
    %349 = vmatprep.subr.mxu0 0.0
    %350 = vmatpush1.msra.mxu0 %v334
    %351 = vmatprep.subr.mxu0 0.0
    %352 = vmatpush1.msra.mxu0 0.0
    %353 = vmatprep.subr.mxu0 0.0
    %354 = vmatpush1.msra.mxu0 0.0
    %355 = vmatprep.subr.mxu0 0.0
    %356 = vmatpush1.msra.mxu0 0.0
    %357 = vmatprep.subr.mxu0 0.0
    %358 = vmatpush1.msra.mxu0 0.0
    %359 = vmatprep.subr.mxu0 0.0
    %360 = vmatpush1.msra.mxu0 0.0
    %361 = vmatprep.subr.mxu0 0.0
    %362 = vmatpush1.msra.mxu0 0.0
    %363 = vmatprep.subr.mxu0 0.0
    %364 = vmatpush1.msra.mxu0 0.0
    %365 = vmatprep.subr.mxu0 0.0
    %366 = vmatpush1.msra.mxu0 0.0
    %367 = vmatprep.subr.mxu0 0.0
    %368 = vmatpush1.msra.mxu0 0.0
    %369 = vmatprep.subr.mxu0 0.0
    %370 = vmatpush1.msra.mxu0 0.0
    %371 = vmatprep.subr.mxu0 0.0
    %372 = vmatpush1.msra.mxu0 0.0
    %373 = vmatprep.subr.mxu0 0.0
    %374 = vmatpush1.msra.mxu0 0.0
    %375 = vmatprep.subr.mxu0 0.0
    %376 = vmatpush1.msra.mxu0 0.0
    %377 = vmatprep.subr.mxu0 0.0
    %378 = vmatpush1.msra.mxu0 0.0
    %379 = vmatprep.subr.mxu0 0.0
    %380 = vmatpush1.msra.mxu0 0.0
    %381 = vmatprep.subr.mxu0 0.0
    %382 = vmatpush1.msra.mxu0 0.0
    %383 = vmatprep.subr.mxu0 0.0
    %384 = vmatpush1.msra.mxu0 0.0
    %385 = vmatprep.subr.mxu0 0.0
    %386 = vmatpush1.msra.mxu0 0.0
    %387 = vmatprep.subr.mxu0 0.0
    %388 = vmatpush1.msra.mxu0 0.0
    %389 = vmatprep.subr.mxu0 0.0
    %390 = vmatpush1.msra.mxu0 0.0
    %391 = vmatprep.subr.mxu0 0.0
    %392 = vmatpush1.msra.mxu0 0.0
    %393 = vmatprep.subr.mxu0 0.0
    %394 = vmatpush1.msra.mxu0 0.0
    %395 = vmatprep.subr.mxu0 0.0
    %396 = vmatpush1.msra.mxu0 0.0
    %397 = vmatprep.subr.mxu0 0.0
    %398 = vmatpush1.msra.mxu0 0.0
    %399 = vmatprep.subr.mxu0 0.0
    %400 = vmatpush1.msra.mxu0 0.0
    %401 = vmatprep.subr.mxu0 0.0
    %402 = vmatpush1.msra.mxu0 0.0
    %403 = vmatprep.subr.mxu0 0.0
    %404 = vmatpush1.msra.mxu0 0.0
    %405 = vmatprep.subr.mxu0 0.0
    %406 = vmatpush1.msra.mxu0 0.0
    %407 = vmatprep.mubr.f32.mxu0 0.0
    %408 = vmatmul.mubr.f32.gmra.mrb[0].mxu0 %v341
    %v409 = vpop.f32.mrb[0].mxu0
    %v410 = vadd.f32 %v339, %v409
    %v411 = vpop.f32.mrb[0].mxu0
    %412 = vdwg.mxu0
    %v413 = vmax.f32 %v410, 0.0
    %v414 = vld [vmem:[#allocation5] sm:$0xff]
    %v415 = vld [vmem:[#allocation5 + $0x8] sm:$0xff]
    %v416 = vld [vmem:[#allocation5 + $0x10] sm:$0xff]
    %v417 = vld [vmem:[#allocation5 + $0x18] sm:$0xff]
    %v418 = vld [vmem:[%s9 + $0x4] sm:$0x1]
    %v419 = vlaneseq
    %v420 = vshrl.u32 %v419, 7
    %v421 = vsub.s32 0, %v420
    %v422 = vrot.slane %v418, %v421
    %v424 = vsel %vm173, %v413, 0
    %426 = vmatprep.subr.mxu0 0.0
    %427 = vmatpush1.msra.mxu0 %v414
    %428 = vmatprep.subr.mxu0 0.0
    %429 = vmatpush1.msra.mxu0 %v415
    %430 = vmatprep.subr.mxu0 0.0
    %431 = vmatpush1.msra.mxu0 %v416
    %432 = vmatprep.subr.mxu0 0.0
    %433 = vmatpush1.msra.mxu0 %v417
    %434 = vmatprep.subr.mxu0 0.0
    %435 = vmatpush1.msra.mxu0 0.0
    %436 = vmatprep.subr.mxu0 0.0
    %437 = vmatpush1.msra.mxu0 0.0
    %438 = vmatprep.subr.mxu0 0.0
    %439 = vmatpush1.msra.mxu0 0.0
    %440 = vmatprep.subr.mxu0 0.0
    %441 = vmatpush1.msra.mxu0 0.0
    %442 = vmatprep.subr.mxu0 0.0
    %443 = vmatpush1.msra.mxu0 0.0
    %444 = vmatprep.subr.mxu0 0.0
    %445 = vmatpush1.msra.mxu0 0.0
    %446 = vmatprep.subr.mxu0 0.0
    %447 = vmatpush1.msra.mxu0 0.0
    %448 = vmatprep.subr.mxu0 0.0
    %449 = vmatpush1.msra.mxu0 0.0
    %450 = vmatprep.subr.mxu0 0.0
    %451 = vmatpush1.msra.mxu0 0.0
    %452 = vmatprep.subr.mxu0 0.0
    %453 = vmatpush1.msra.mxu0 0.0
    %454 = vmatprep.subr.mxu0 0.0
    %455 = vmatpush1.msra.mxu0 0.0
    %456 = vmatprep.subr.mxu0 0.0
    %457 = vmatpush1.msra.mxu0 0.0
    %458 = vmatprep.subr.mxu0 0.0
    %459 = vmatpush1.msra.mxu0 0.0
    %460 = vmatprep.subr.mxu0 0.0
    %461 = vmatpush1.msra.mxu0 0.0
    %462 = vmatprep.subr.mxu0 0.0
    %463 = vmatpush1.msra.mxu0 0.0
    %464 = vmatprep.subr.mxu0 0.0
    %465 = vmatpush1.msra.mxu0 0.0
    %466 = vmatprep.subr.mxu0 0.0
    %467 = vmatpush1.msra.mxu0 0.0
    %468 = vmatprep.subr.mxu0 0.0
    %469 = vmatpush1.msra.mxu0 0.0
    %470 = vmatprep.subr.mxu0 0.0
    %471 = vmatpush1.msra.mxu0 0.0
    %472 = vmatprep.subr.mxu0 0.0
    %473 = vmatpush1.msra.mxu0 0.0
    %474 = vmatprep.subr.mxu0 0.0
    %475 = vmatpush1.msra.mxu0 0.0
    %476 = vmatprep.subr.mxu0 0.0
    %477 = vmatpush1.msra.mxu0 0.0
    %478 = vmatprep.subr.mxu0 0.0
    %479 = vmatpush1.msra.mxu0 0.0
    %480 = vmatprep.subr.mxu0 0.0
    %481 = vmatpush1.msra.mxu0 0.0
    %482 = vmatprep.subr.mxu0 0.0
    %483 = vmatpush1.msra.mxu0 0.0
    %484 = vmatprep.subr.mxu0 0.0
    %485 = vmatpush1.msra.mxu0 0.0
    %486 = vmatprep.subr.mxu0 0.0
    %487 = vmatpush1.msra.mxu0 0.0
    %488 = vmatprep.subr.mxu0 0.0
    %489 = vmatpush1.msra.mxu0 0.0
    %490 = vmatprep.mubr.f32.mxu0 0.0
    %491 = vmatmul.mubr.f32.gmra.mrb[0].mxu0 %v424
    %v492 = vpop.f32.mrb[0].mxu0
    %v493 = vadd.f32 %v422, %v492
    %v494 = vpop.f32.mrb[0].mxu0
    %495 = vdwg.mxu0
    %v496 = vmax.f32 %v493, 0.0
    %v497 = vld [vmem:[#allocation7] sm:$0xff]
    %v498 = vld [vmem:[#allocation7 + $0x8] sm:$0xff]
    %v499 = vld [vmem:[#allocation7 + $0x10] sm:$0xff]
    %v500 = vld [vmem:[#allocation7 + $0x18] sm:$0xff]
    %v501 = vld [vmem:[%s9 + $0x5] sm:$0x1]
    %v502 = vlaneseq
    %v503 = vshrl.u32 %v502, 7
    %v504 = vsub.s32 0, %v503
    %v505 = vrot.slane %v501, %v504
    %v507 = vsel %vm173, %v496, 0
    %509 = vmatprep.subr.mxu0 0.0
    %510 = vmatpush1.msra.mxu0 %v497
    %511 = vmatprep.subr.mxu0 0.0
    %512 = vmatpush1.msra.mxu0 %v498
    %513 = vmatprep.subr.mxu0 0.0
    %514 = vmatpush1.msra.mxu0 %v499
    %515 = vmatprep.subr.mxu0 0.0
    %516 = vmatpush1.msra.mxu0 %v500
    %517 = vmatprep.subr.mxu0 0.0
    %518 = vmatpush1.msra.mxu0 0.0
    %519 = vmatprep.subr.mxu0 0.0
    %520 = vmatpush1.msra.mxu0 0.0
    %521 = vmatprep.subr.mxu0 0.0
    %522 = vmatpush1.msra.mxu0 0.0
    %523 = vmatprep.subr.mxu0 0.0
    %524 = vmatpush1.msra.mxu0 0.0
    %525 = vmatprep.subr.mxu0 0.0
    %526 = vmatpush1.msra.mxu0 0.0
    %527 = vmatprep.subr.mxu0 0.0
    %528 = vmatpush1.msra.mxu0 0.0
    %529 = vmatprep.subr.mxu0 0.0
    %530 = vmatpush1.msra.mxu0 0.0
    %531 = vmatprep.subr.mxu0 0.0
    %532 = vmatpush1.msra.mxu0 0.0
    %533 = vmatprep.subr.mxu0 0.0
    %534 = vmatpush1.msra.mxu0 0.0
    %535 = vmatprep.subr.mxu0 0.0
    %536 = vmatpush1.msra.mxu0 0.0
    %537 = vmatprep.subr.mxu0 0.0
    %538 = vmatpush1.msra.mxu0 0.0
    %539 = vmatprep.subr.mxu0 0.0
    %540 = vmatpush1.msra.mxu0 0.0
    %541 = vmatprep.subr.mxu0 0.0
    %542 = vmatpush1.msra.mxu0 0.0
    %543 = vmatprep.subr.mxu0 0.0
    %544 = vmatpush1.msra.mxu0 0.0
    %545 = vmatprep.subr.mxu0 0.0
    %546 = vmatpush1.msra.mxu0 0.0
    %547 = vmatprep.subr.mxu0 0.0
    %548 = vmatpush1.msra.mxu0 0.0
    %549 = vmatprep.subr.mxu0 0.0
    %550 = vmatpush1.msra.mxu0 0.0
    %551 = vmatprep.subr.mxu0 0.0
    %552 = vmatpush1.msra.mxu0 0.0
    %553 = vmatprep.subr.mxu0 0.0
    %554 = vmatpush1.msra.mxu0 0.0
    %555 = vmatprep.subr.mxu0 0.0
    %556 = vmatpush1.msra.mxu0 0.0
    %557 = vmatprep.subr.mxu0 0.0
    %558 = vmatpush1.msra.mxu0 0.0
    %559 = vmatprep.subr.mxu0 0.0
    %560 = vmatpush1.msra.mxu0 0.0
    %561 = vmatprep.subr.mxu0 0.0
    %562 = vmatpush1.msra.mxu0 0.0
    %563 = vmatprep.subr.mxu0 0.0
    %564 = vmatpush1.msra.mxu0 0.0
    %565 = vmatprep.subr.mxu0 0.0
    %566 = vmatpush1.msra.mxu0 0.0
    %567 = vmatprep.subr.mxu0 0.0
    %568 = vmatpush1.msra.mxu0 0.0
    %569 = vmatprep.subr.mxu0 0.0
    %570 = vmatpush1.msra.mxu0 0.0
    %571 = vmatprep.subr.mxu0 0.0
    %572 = vmatpush1.msra.mxu0 0.0
    %573 = vmatprep.mubr.f32.mxu0 0.0
    %574 = vmatmul.mubr.f32.gmra.mrb[0].mxu0 %v507
    %v575 = vpop.f32.mrb[0].mxu0
    %v576 = vadd.f32 %v505, %v575
    %v577 = vpop.f32.mrb[0].mxu0
    %578 = vdwg.mxu0
    %v579 = vmax.f32 %v576, 0.0
    %v580 = vld [vmem:[%s7] sm:$0xff]
    %v581 = vld [vmem:[%s7 + $0x8] sm:$0xff]
    %v582 = vld [vmem:[%s7 + $0x10] sm:$0xff]
    %v583 = vld [vmem:[%s7 + $0x18] sm:$0xff]
    %v584 = vld [vmem:[%s9 + $0x6] sm:$0x1]
    %v585 = vlaneseq
    %v586 = vshrl.u32 %v585, 7
    %v587 = vsub.s32 0, %v586
    %v588 = vrot.slane %v584, %v587
    %v590 = vsel %vm173, %v579, 0
    %592 = vmatprep.subr.mxu0 0.0
    %593 = vmatpush1.msra.mxu0 %v580
    %594 = vmatprep.subr.mxu0 0.0
    %595 = vmatpush1.msra.mxu0 %v581
    %596 = vmatprep.subr.mxu0 0.0
    %597 = vmatpush1.msra.mxu0 %v582
    %598 = vmatprep.subr.mxu0 0.0
    %599 = vmatpush1.msra.mxu0 %v583
    %600 = vmatprep.subr.mxu0 0.0
    %601 = vmatpush1.msra.mxu0 0.0
    %602 = vmatprep.subr.mxu0 0.0
    %603 = vmatpush1.msra.mxu0 0.0
    %604 = vmatprep.subr.mxu0 0.0
    %605 = vmatpush1.msra.mxu0 0.0
    %606 = vmatprep.subr.mxu0 0.0
    %607 = vmatpush1.msra.mxu0 0.0
    %608 = vmatprep.subr.mxu0 0.0
    %609 = vmatpush1.msra.mxu0 0.0
    %610 = vmatprep.subr.mxu0 0.0
    %611 = vmatpush1.msra.mxu0 0.0
    %612 = vmatprep.subr.mxu0 0.0
    %613 = vmatpush1.msra.mxu0 0.0
    %614 = vmatprep.subr.mxu0 0.0
    %615 = vmatpush1.msra.mxu0 0.0
    %616 = vmatprep.subr.mxu0 0.0
    %617 = vmatpush1.msra.mxu0 0.0
    %618 = vmatprep.subr.mxu0 0.0
    %619 = vmatpush1.msra.mxu0 0.0
    %620 = vmatprep.subr.mxu0 0.0
    %621 = vmatpush1.msra.mxu0 0.0
    %622 = vmatprep.subr.mxu0 0.0
    %623 = vmatpush1.msra.mxu0 0.0
    %624 = vmatprep.subr.mxu0 0.0
    %625 = vmatpush1.msra.mxu0 0.0
    %626 = vmatprep.subr.mxu0 0.0
    %627 = vmatpush1.msra.mxu0 0.0
    %628 = vmatprep.subr.mxu0 0.0
    %629 = vmatpush1.msra.mxu0 0.0
    %630 = vmatprep.subr.mxu0 0.0
    %631 = vmatpush1.msra.mxu0 0.0
    %632 = vmatprep.subr.mxu0 0.0
    %633 = vmatpush1.msra.mxu0 0.0
    %634 = vmatprep.subr.mxu0 0.0
    %635 = vmatpush1.msra.mxu0 0.0
    %636 = vmatprep.subr.mxu0 0.0
    %637 = vmatpush1.msra.mxu0 0.0
    %638 = vmatprep.subr.mxu0 0.0
    %639 = vmatpush1.msra.mxu0 0.0
    %640 = vmatprep.subr.mxu0 0.0
    %641 = vmatpush1.msra.mxu0 0.0
    %642 = vmatprep.subr.mxu0 0.0
    %643 = vmatpush1.msra.mxu0 0.0
    %644 = vmatprep.subr.mxu0 0.0
    %645 = vmatpush1.msra.mxu0 0.0
    %646 = vmatprep.subr.mxu0 0.0
    %647 = vmatpush1.msra.mxu0 0.0
    %648 = vmatprep.subr.mxu0 0.0
    %649 = vmatpush1.msra.mxu0 0.0
    %650 = vmatprep.subr.mxu0 0.0
    %651 = vmatpush1.msra.mxu0 0.0
    %652 = vmatprep.subr.mxu0 0.0
    %653 = vmatpush1.msra.mxu0 0.0
    %654 = vmatprep.subr.mxu0 0.0
    %655 = vmatpush1.msra.mxu0 0.0
    %656 = vmatprep.mubr.f32.mxu0 0.0
    %657 = vmatmul.mubr.f32.gmra.mrb[0].mxu0 %v590
    %v658 = vpop.f32.mrb[0].mxu0
    %v659 = vadd.f32 %v588, %v658
    %v660 = vpop.f32.mrb[0].mxu0
    %661 = vdwg.mxu0
    %v662 = vmax.f32 %v659, 0.0
    %v663 = vld [vmem:[%s8] sm:$0xff]
    %v664 = vld [vmem:[%s8 + $0x8] sm:$0xff]
    %v665 = vld [vmem:[%s8 + $0x10] sm:$0xff]
    %v666 = vld [vmem:[%s8 + $0x18] sm:$0xff]
    %v667 = vld [vmem:[%s9 + $0x7] sm:$0x1]
    %v668 = vlaneseq
    %v669 = vshrl.u32 %v668, 7
    %v670 = vsub.s32 0, %v669
    %v671 = vrot.slane %v667, %v670
    %v673 = vsel %vm173, %v662, 0
    %675 = vmatprep.subr.mxu0 0.0
    %676 = vmatpush1.msra.mxu0 %v663
    %677 = vmatprep.subr.mxu0 0.0
    %678 = vmatpush1.msra.mxu0 %v664
    %679 = vmatprep.subr.mxu0 0.0
    %680 = vmatpush1.msra.mxu0 %v665
    %681 = vmatprep.subr.mxu0 0.0
    %682 = vmatpush1.msra.mxu0 %v666
    %683 = vmatprep.subr.mxu0 0.0
    %684 = vmatpush1.msra.mxu0 0.0
    %685 = vmatprep.subr.mxu0 0.0
    %686 = vmatpush1.msra.mxu0 0.0
    %687 = vmatprep.subr.mxu0 0.0
    %688 = vmatpush1.msra.mxu0 0.0
    %689 = vmatprep.subr.mxu0 0.0
    %690 = vmatpush1.msra.mxu0 0.0
    %691 = vmatprep.subr.mxu0 0.0
    %692 = vmatpush1.msra.mxu0 0.0
    %693 = vmatprep.subr.mxu0 0.0
    %694 = vmatpush1.msra.mxu0 0.0
    %695 = vmatprep.subr.mxu0 0.0
    %696 = vmatpush1.msra.mxu0 0.0
    %697 = vmatprep.subr.mxu0 0.0
    %698 = vmatpush1.msra.mxu0 0.0
    %699 = vmatprep.subr.mxu0 0.0
    %700 = vmatpush1.msra.mxu0 0.0
    %701 = vmatprep.subr.mxu0 0.0
    %702 = vmatpush1.msra.mxu0 0.0
    %703 = vmatprep.subr.mxu0 0.0
    %704 = vmatpush1.msra.mxu0 0.0
    %705 = vmatprep.subr.mxu0 0.0
    %706 = vmatpush1.msra.mxu0 0.0
    %707 = vmatprep.subr.mxu0 0.0
    %708 = vmatpush1.msra.mxu0 0.0
    %709 = vmatprep.subr.mxu0 0.0
    %710 = vmatpush1.msra.mxu0 0.0
    %711 = vmatprep.subr.mxu0 0.0
    %712 = vmatpush1.msra.mxu0 0.0
    %713 = vmatprep.subr.mxu0 0.0
    %714 = vmatpush1.msra.mxu0 0.0
    %715 = vmatprep.subr.mxu0 0.0
    %716 = vmatpush1.msra.mxu0 0.0
    %717 = vmatprep.subr.mxu0 0.0
    %718 = vmatpush1.msra.mxu0 0.0
    %719 = vmatprep.subr.mxu0 0.0
    %720 = vmatpush1.msra.mxu0 0.0
    %721 = vmatprep.subr.mxu0 0.0
    %722 = vmatpush1.msra.mxu0 0.0
    %723 = vmatprep.subr.mxu0 0.0
    %724 = vmatpush1.msra.mxu0 0.0
    %725 = vmatprep.subr.mxu0 0.0
    %726 = vmatpush1.msra.mxu0 0.0
    %727 = vmatprep.subr.mxu0 0.0
    %728 = vmatpush1.msra.mxu0 0.0
    %729 = vmatprep.subr.mxu0 0.0
    %730 = vmatpush1.msra.mxu0 0.0
    %731 = vmatprep.subr.mxu0 0.0
    %732 = vmatpush1.msra.mxu0 0.0
    %733 = vmatprep.subr.mxu0 0.0
    %734 = vmatpush1.msra.mxu0 0.0
    %735 = vmatprep.subr.mxu0 0.0
    %736 = vmatpush1.msra.mxu0 0.0
    %737 = vmatprep.subr.mxu0 0.0
    %738 = vmatpush1.msra.mxu0 0.0
    %739 = vmatprep.mubr.f32.mxu0 0.0
    %740 = vmatmul.mubr.f32.gmra.mrb[0].mxu0 %v673
    %v741 = vpop.f32.mrb[0].mxu0
    %v742 = vadd.f32 %v671, %v741
    %v743 = vpop.f32.mrb[0].mxu0
    %744 = vdwg.mxu0
    %v745 = vtanh.pop %v742
    %v746 = vtanh.pop %v745
    %vm747 = vcmask 48128
    %748 = vst.msk [vmem:[#allocation8] sm:$0xff] %vm747, %v746
    // Predicated region
    $region54: #{tpu_custom_call.1} parent=1 // pred_check
      _
    $region55: #{tpu_custom_call.1} parent=1 // pred_check_branch
      %750 = sbr.rel (0) target = $region57
    $region56: #{tpu_custom_call.1} parent=1 // pred_region
      %s752 = ssub.s32 128, 128
      %753 = vsyncadd [#allocation4], %s752
      %s755 = sshll.u32 [#allocation8], 4
      %s756 = int_to_ptr.vmem [resolvable:$true] %s755
      %758 = dma.vmem_to_hbm [thread:$0]  %s756, 128, %s10, [#allocation4]
    $region57: #{tpu_custom_call.1} parent=1 // pred_fallthru
      _
    // Predicated region
    $region58: #{tpu_custom_call.1} parent=1 // pred_check
      _
    $region59: #{tpu_custom_call.1} parent=1 // pred_check_branch
      %760 = sbr.rel (0) target = $region61
    $region60: #{tpu_custom_call.1} parent=1 // pred_region
      %761 = dma.done [#allocation4], 128
    $region61: #{tpu_custom_call.1} parent=1 // pred_fallthru
      _
    %762 = vsyncpa [#allocation3], 1
    %763 = vsyncpa [#allocation6], 1
    %764 = vsyncpa [#allocation4], 1

</llo_original>
